<compile_context>
chip_gen: v7x
topology: tpu7x:2x2x1
jax: 0.10.0
libtpu: 0.0.40
codegen_flags: <defaults>
</compile_context>

<pallas_src>
import jax
import jax.numpy as jnp
from jax.experimental import pallas as pl
from jax.experimental.pallas import tpu as pltpu

BN_EPS = 1e-5   # PyTorch BatchNorm1d default eps
SUBLANE = 8


def _round_up(n, m):
    return ((n + m - 1) // m) * m


def _fold_bn(w, b, gamma, beta, mean, var):
    """Fold eval-mode BatchNorm1d into the preceding Linear (y = x@w' + b')."""
    s = gamma * jax.lax.rsqrt(var + BN_EPS)          # (1, F)
    return w * s, (b - mean) * s + beta


# ----------------------------------------------------------------------------- kernel
def ffnn_kernel(x_ref, w1_ref, b1_ref, w2_ref, b2_ref, w3_ref, b3_ref, out_ref):
    # hidden block 1: (Linear with folded BN) -> ReLU  [Dropout = identity in eval]
    # x / weights are bf16; MXU accumulates in f32; bias-add + ReLU in f32.
    h = jnp.dot(x_ref[...], w1_ref[...],
                preferred_element_type=jnp.float32) + b1_ref[...]
    h = jnp.maximum(h, 0.0)
    # hidden block 2
    h = jnp.dot(h.astype(w2_ref.dtype), w2_ref[...],
                preferred_element_type=jnp.float32) + b2_ref[...]
    h = jnp.maximum(h, 0.0)
    # output head: minimal single-column output (masked store, but 128x less HBM)
    out_ref[...] = jnp.dot(h.astype(w3_ref.dtype), w3_ref[...],
                           preferred_element_type=jnp.float32) + b3_ref[...]


# ---------------------------------------------------------------------- param packing
def prepare_params(params, compute_dtype=jnp.bfloat16):
    """One-time prep: fold BN into Linears, cast matmul weights to compute_dtype.

    Do this once outside the inference loop; biases stay f32 (added post-MXU).
    """
    (w1, b1, g1, be1, m1, v1,
     w2, b2, g2, be2, m2, v2,
     w3, b3) = params
    w1f, b1f = _fold_bn(w1, b1, g1, be1, m1, v1)
    w2f, b2f = _fold_bn(w2, b2, g2, be2, m2, v2)
    return (w1f.astype(compute_dtype), b1f.astype(jnp.float32),
            w2f.astype(compute_dtype), b2f.astype(jnp.float32),
            w3.astype(compute_dtype), b3.astype(jnp.float32))


# ---------------------------------------------------------------------------- wrapper
def ffnn_forward(x, packed, *, max_batch_tile=1024, compute_dtype=jnp.bfloat16):
    """x: (B, input_dim) f32; packed: output of prepare_params()."""
    w1, b1, w2, b2, w3, b3 = packed
    B, in_dim = x.shape
    hid = w1.shape[1]

    # Batch tile: multiple of 8, capped at max_batch_tile, and chosen so the grid has
    # at least 2 steps when B allows it (v7x megacore sharding of the "parallel" axis).
    tb = min(max_batch_tile, max(SUBLANE, _round_up(pl.cdiv(B, 2), SUBLANE)))
    b_p = _round_up(B, tb)

    # Only batch is padded (rows are independent, extra rows are discarded).
    x_c = x.astype(compute_dtype)
    if b_p != B:
        x_c = jnp.pad(x_c, ((0, b_p - B), (0, 0)))

    grid = (b_p // tb,)

    def resident(shape):
        # Weights/biases: same block every grid step -> stay pinned in VMEM.
        return pl.BlockSpec(shape, lambda i: (0, 0))

    itemsize = jnp.dtype(compute_dtype).itemsize
    flops = 2 * b_p * (in_dim * hid + hid * hid + hid)
    bytes_accessed = (x_c.size * itemsize
                      + (w1.size + w2.size + w3.size) * itemsize
                      + (b1.size + b2.size + b3.size) * 4
                      + b_p * 4)

    out = pl.pallas_call(
        ffnn_kernel,
        out_shape=jax.ShapeDtypeStruct((b_p, 1), jnp.float32),
        grid=grid,
        in_specs=[
            # Activations: the only per-step streaming operand, tiled on batch.
            # (Last dim == full array dim, so a 32-wide block is legal.)
            pl.BlockSpec((tb, in_dim), lambda i: (i, 0)),
            resident((in_dim, hid)), resident((1, hid)),
            resident((hid, hid)), resident((1, hid)),
            resident((hid, 1)), resident((1, 1)),
        ],
        out_specs=pl.BlockSpec((tb, 1), lambda i: (i, 0)),
        compiler_params=pltpu.CompilerParams(
            dimension_semantics=("parallel",)),
        cost_estimate=pl.CostEstimate(
            flops=flops, transcendentals=0, bytes_accessed=bytes_accessed),
    )(x_c, w1, b1, w2, b2, w3, b3)

    return out if b_p == B else out[:B]


# ------------------------------------------------------------------------------ setup
def init_params(key, input_dim, hidden):
    """Deterministic synthetic PyTorch-style parameters for 2 hidden blocks + head.

    1-D PyTorch parameters (biases, BN gamma/beta/mean/var) are stored as (1, F).
    Linear weights stored as (in_features, out_features) so y = x @ W + b
    (numerically identical to PyTorch's x @ W.T with W of shape (out, in)).
    """
    ks = jax.random.split(key, 16)

    def lin(kw, kb, fan_in, fan_out):
        w = 0.1 * jax.random.normal(kw, (fan_in, fan_out), jnp.float32)
        b = 0.1 * jax.random.normal(kb, (1, fan_out), jnp.float32)
        return w, b

    def bn(kg, kb, km, kv, f):
        g = 1.0 + 0.1 * jax.random.normal(kg, (1, f), jnp.float32)       # gamma
        be = 0.1 * jax.random.normal(kb, (1, f), jnp.float32)            # beta
        m = 0.1 * jax.random.normal(km, (1, f), jnp.float32)             # running_mean
        v = 0.5 + jnp.abs(jax.random.normal(kv, (1, f), jnp.float32))    # running_var > 0
        return g, be, m, v

    w1, b1 = lin(ks[0], ks[1], input_dim, hidden)
    g1, be1, m1, v1 = bn(ks[2], ks[3], ks[4], ks[5], hidden)
    w2, b2 = lin(ks[6], ks[7], hidden, hidden)
    g2, be2, m2, v2 = bn(ks[8], ks[9], ks[10], ks[11], hidden)
    w3, b3 = lin(ks[12], ks[13], hidden, 1)

    return (w1, b1, g1, be1, m1, v1,
            w2, b2, g2, be2, m2, v2,
            w3, b3)


def reference_forward(x, params):
    """Pure-JAX f32 reference of the eval-mode forward (unfolded BN)."""
    (w1, b1, g1, be1, m1, v1,
     w2, b2, g2, be2, m2, v2,
     w3, b3) = params
    h = x @ w1 + b1
    h = (h - m1) / jnp.sqrt(v1 + BN_EPS) * g1 + be1
    h = jnp.maximum(h, 0.0)
    h = h @ w2 + b2
    h = (h - m2) / jnp.sqrt(v2 + BN_EPS) * g2 + be2
    h = jnp.maximum(h, 0.0)
    return h @ w3 + b3


def reference_forward_bf16(x, packed):
    """Pure-JAX reference matching the kernel's bf16-inputs / f32-accumulate math."""
    w1, b1, w2, b2, w3, b3 = packed
    h = jnp.dot(x.astype(w1.dtype), w1, preferred_element_type=jnp.float32) + b1
    h = jnp.maximum(h, 0.0)
    h = jnp.dot(h.astype(w2.dtype), w2, preferred_element_type=jnp.float32) + b2
    h = jnp.maximum(h, 0.0)
    return jnp.dot(h.astype(w3.dtype), w3, preferred_element_type=jnp.float32) + b3


if __name__ == "__main__":
    # RegressionNN(input_dim=32, num_hidden_units=64, dropout_rate=0.1, num_layers=2)
    B, INPUT_DIM, HIDDEN = 16, 32, 64

    key = jax.random.PRNGKey(0)
    kx, kp = jax.random.split(key)
    x = jax.random.normal(kx, (B, INPUT_DIM), jnp.float32)
    params = init_params(kp, INPUT_DIM, HIDDEN)

    packed = prepare_params(params)           # one-time: fold BN + bf16 cast
    out = ffnn_forward(x, packed)
    out = jax.block_until_ready(out)
    assert out.shape == (B, 1), out.shape

    # Tight check against a reference using the same bf16-input / f32-accumulate math.
    ref_bf16 = reference_forward_bf16(x, packed)
    assert jnp.allclose(out, ref_bf16, atol=2e-3, rtol=2e-2), "mismatch vs bf16 reference"

    # Loose sanity check against the pure f32 eval-mode module semantics.
    ref_f32 = reference_forward(x, params)
    assert jnp.allclose(out, ref_f32, atol=5e-2, rtol=5e-2), "mismatch vs f32 reference"

    print("KERNEL_OK")
</pallas_src>

<mosaic_0001>
module attributes {stable_mosaic.version = 11 : i64} {
  func.func @ffnn_kernel(%arg0: i32, %arg1: memref<8x32xbf16, #tpu.memory_space<vmem>>, %arg2: memref<32x64xbf16, #tpu.memory_space<vmem>>, %arg3: memref<1x64xf32, #tpu.memory_space<vmem>>, %arg4: memref<64x64xbf16, #tpu.memory_space<vmem>>, %arg5: memref<1x64xf32, #tpu.memory_space<vmem>>, %arg6: memref<64x1xbf16, #tpu.memory_space<vmem>>, %arg7: memref<1x1xf32, #tpu.memory_space<vmem>>, %arg8: memref<8x1xf32, #tpu.memory_space<vmem>>) attributes {dimension_semantics = [#tpu.dimension_semantics<parallel>], iteration_bounds = array<i64: 2>, scalar_prefetch = 0 : i64, scratch_operands = 0 : i64, tpu.core_type = #tpu.core_type<tc>, window_params = [{transform_indices = @transform_0, window_bounds = array<i64: 8, 32>}, {pipeline_mode = #tpu.pipeline_mode<synchronous>, transform_indices = @transform_1, window_bounds = array<i64: 32, 64>}, {pipeline_mode = #tpu.pipeline_mode<synchronous>, transform_indices = @transform_2, window_bounds = array<i64: 1, 64>}, {pipeline_mode = #tpu.pipeline_mode<synchronous>, transform_indices = @transform_3, window_bounds = array<i64: 64, 64>}, {pipeline_mode = #tpu.pipeline_mode<synchronous>, transform_indices = @transform_4, window_bounds = array<i64: 1, 64>}, {pipeline_mode = #tpu.pipeline_mode<synchronous>, transform_indices = @transform_5, window_bounds = array<i64: 64, 1>}, {pipeline_mode = #tpu.pipeline_mode<synchronous>, transform_indices = @transform_6, window_bounds = array<i64: 1, 1>}, {transform_indices = @transform_7, window_bounds = array<i64: 8, 1>}]} {
    %c0 = arith.constant 0 : index
    %c0_0 = arith.constant 0 : index
    %0 = vector.load %arg1[%c0, %c0_0] : memref<8x32xbf16, #tpu.memory_space<vmem>>, vector<8x32xbf16>
    %c0_1 = arith.constant 0 : index
    %c0_2 = arith.constant 0 : index
    %1 = vector.load %arg2[%c0_1, %c0_2] : memref<32x64xbf16, #tpu.memory_space<vmem>>, vector<32x64xbf16>
    %cst = arith.constant dense<0.000000e+00> : vector<8x64xf32>
    %2 = tpu.matmul %0, %1, %cst {dimension_numbers = #tpu.dot_dimension_numbers<[1], [0], [0], [1], [0, 0, 1, 1], [], []>} : vector<8x32xbf16>, vector<32x64xbf16>, vector<8x64xf32> -> vector<8x64xf32>
    %c0_3 = arith.constant 0 : index
    %c0_4 = arith.constant 0 : index
    %3 = vector.load %arg3[%c0_3, %c0_4] : memref<1x64xf32, #tpu.memory_space<vmem>>, vector<1x64xf32>
    %4 = vector.broadcast %3 : vector<1x64xf32> to vector<8x64xf32>
    %5 = arith.addf %2, %4 : vector<8x64xf32>
    %cst_5 = arith.constant 0.000000e+00 : f32
    %6 = vector.broadcast %cst_5 : f32 to vector<8x64xf32>
    %7 = arith.maximumf %5, %6 : vector<8x64xf32>
    %8 = arith.truncf %7 : vector<8x64xf32> to vector<8x64xbf16>
    %c0_6 = arith.constant 0 : index
    %c0_7 = arith.constant 0 : index
    %9 = vector.load %arg4[%c0_6, %c0_7] : memref<64x64xbf16, #tpu.memory_space<vmem>>, vector<64x64xbf16>
    %cst_8 = arith.constant dense<0.000000e+00> : vector<8x64xf32>
    %10 = tpu.matmul %8, %9, %cst_8 {dimension_numbers = #tpu.dot_dimension_numbers<[1], [0], [0], [1], [0, 0, 1, 1], [], []>} : vector<8x64xbf16>, vector<64x64xbf16>, vector<8x64xf32> -> vector<8x64xf32>
    %c0_9 = arith.constant 0 : index
    %c0_10 = arith.constant 0 : index
    %11 = vector.load %arg5[%c0_9, %c0_10] : memref<1x64xf32, #tpu.memory_space<vmem>>, vector<1x64xf32>
    %12 = vector.broadcast %11 : vector<1x64xf32> to vector<8x64xf32>
    %13 = arith.addf %10, %12 : vector<8x64xf32>
    %cst_11 = arith.constant 0.000000e+00 : f32
    %14 = vector.broadcast %cst_11 : f32 to vector<8x64xf32>
    %15 = arith.maximumf %13, %14 : vector<8x64xf32>
    %16 = arith.truncf %15 : vector<8x64xf32> to vector<8x64xbf16>
    %c0_12 = arith.constant 0 : index
    %c0_13 = arith.constant 0 : index
    %17 = vector.load %arg6[%c0_12, %c0_13] : memref<64x1xbf16, #tpu.memory_space<vmem>>, vector<64x1xbf16>
    %cst_14 = arith.constant dense<0.000000e+00> : vector<8x1xf32>
    %18 = tpu.matmul %16, %17, %cst_14 {dimension_numbers = #tpu.dot_dimension_numbers<[1], [0], [0], [1], [0, 0, 1, 1], [], []>} : vector<8x64xbf16>, vector<64x1xbf16>, vector<8x1xf32> -> vector<8x1xf32>
    %c0_15 = arith.constant 0 : index
    %c0_16 = arith.constant 0 : index
    %19 = vector.load %arg7[%c0_15, %c0_16] : memref<1x1xf32, #tpu.memory_space<vmem>>, vector<1x1xf32>
    %20 = vector.broadcast %19 : vector<1x1xf32> to vector<8x1xf32>
    %21 = arith.addf %18, %20 : vector<8x1xf32>
    %c0_17 = arith.constant 0 : index
    %c0_18 = arith.constant 0 : index
    %22 = vector.load %arg8[%c0_17, %c0_18] : memref<8x1xf32, #tpu.memory_space<vmem>>, vector<8x1xf32>
    tpu.vector_store %arg8[%c0_17, %c0_18], %21 {strides = array<i32>} : memref<8x1xf32, #tpu.memory_space<vmem>>, vector<8x1xf32>,
    return
  }
  func.func @transform_0(%arg0: i32) -> (i32, i32) {
    %c0_i32 = arith.constant 0 : i32
    %c0_i32_0 = arith.constant 0 : i32
    return %arg0, %c0_i32 : i32, i32
  }
  func.func @transform_1(%arg0: i32) -> (i32, i32) {
    %c0_i32 = arith.constant 0 : i32
    %c0_i32_0 = arith.constant 0 : i32
    %c0_i32_1 = arith.constant 0 : i32
    return %c0_i32, %c0_i32_0 : i32, i32
  }
  func.func @transform_2(%arg0: i32) -> (i32, i32) {
    %c0_i32 = arith.constant 0 : i32
    %c0_i32_0 = arith.constant 0 : i32
    %c0_i32_1 = arith.constant 0 : i32
    return %c0_i32, %c0_i32_0 : i32, i32
  }
  func.func @transform_3(%arg0: i32) -> (i32, i32) {
    %c0_i32 = arith.constant 0 : i32
    %c0_i32_0 = arith.constant 0 : i32
    %c0_i32_1 = arith.constant 0 : i32
    return %c0_i32, %c0_i32_0 : i32, i32
  }
  func.func @transform_4(%arg0: i32) -> (i32, i32) {
    %c0_i32 = arith.constant 0 : i32
    %c0_i32_0 = arith.constant 0 : i32
    %c0_i32_1 = arith.constant 0 : i32
    return %c0_i32, %c0_i32_0 : i32, i32
  }
  func.func @transform_5(%arg0: i32) -> (i32, i32) {
    %c0_i32 = arith.constant 0 : i32
    %c0_i32_0 = arith.constant 0 : i32
    %c0_i32_1 = arith.constant 0 : i32
    return %c0_i32, %c0_i32_0 : i32, i32
  }
  func.func @transform_6(%arg0: i32) -> (i32, i32) {
    %c0_i32 = arith.constant 0 : i32
    %c0_i32_0 = arith.constant 0 : i32
    %c0_i32_1 = arith.constant 0 : i32
    return %c0_i32, %c0_i32_0 : i32, i32
  }
  func.func @transform_7(%arg0: i32) -> (i32, i32) {
    %c0_i32 = arith.constant 0 : i32
    %c0_i32_0 = arith.constant 0 : i32
    return %arg0, %c0_i32 : i32, i32
  }
}

</mosaic_0001>

<llo_original>
// kernel: tpu_custom_call.1
$region0: #{tpu_custom_call.1}
  #allocation0 [shape = 'u32[]', space=smem, size = 0x4, offset = 0x4, fixed_abs, tag = 'smem constant byte address 0x4 - core index']
  #allocation1 [shape = 'u32[144,128]{1,0:T(1,128)}', space=vmem, size = 0x12000, scoped, tag = 'internal scratch']
  #allocation2 [shape = 'f32[1,1]{1,0:T(1,128)S(1)}', space=vmem, size = 0x200, scoped, tag = 'scoped memory for tpu_custom_call.1']
  %s0 = inlined_call_operand.hbm [shape: bf16[16,32], index: 0, kind: input, shape index: {}]
  %s1 = inlined_call_operand.vmem [shape: bf16[32,64], index: 1, kind: input, shape index: {}]
  %s2 = inlined_call_operand.hbm [shape: f32[1,64], index: 2, kind: input, shape index: {}]
  %s3 = inlined_call_operand.vmem [shape: bf16[64,64], index: 3, kind: input, shape index: {}]
  %s4 = inlined_call_operand.vmem [shape: f32[1,64], index: 4, kind: input, shape index: {}]
  %s5 = inlined_call_operand.vmem [shape: bf16[64,1], index: 5, kind: input, shape index: {}]
  %s6 = inlined_call_operand.<no memory space> [shape: f32[1,1], index: 6, kind: input, shape index: {}]
  %s7 = inlined_call_operand.vmem [shape: f32[16,1], index: 7, kind: output, shape index: {}]
  %s8 = sld [smem:[#allocation0]]
  $region69: #{tpu_custom_call.1} parent=0
    _
  %s10 = ssub.s32 1, %s8
  %s11 = scalar_select 0, %s10, %s8
  %v12 = vstv %s6
  %13 = vst [vmem:[#allocation2] sm:$0x1] %v12
  $region1: #{tpu_custom_call.1} parent=0
    #allocation3 [shape = 'u8[4096]{0}', space=vmem, size = 0x1000, scoped, tag = 'input window, operand 0']
    #allocation4 [shape = 's32[2]{0}', space=sflag, size = 0x8, scoped, tag = 'scoped memory for tpu_custom_call.1']
    #allocation5 [shape = 'u8[512]{0}', space=vmem, size = 0x400, scoped, tag = 'input window, operand 2, single buffered']
    #allocation6 [shape = 's32[1]{0}', space=sflag, size = 0x4, scoped, tag = 'scoped memory for tpu_custom_call.1']
    %14 = vsyncpa [#allocation4], 0
    %s15 = scalar_lea.sflag [#allocation4], 1
    %16 = vsyncpa %s15, 0
    %17 = vsyncpa [#allocation6], 0
    loop: start=0, step=1, limit=4
    $region2: #{tpu_custom_call.1} parent=1 // loop_pre_header
      _
    $region3: #{tpu_custom_call.1} parent=1 // loop_header
      %s19 = sphi 0, %s23
      %p20 = scmp.ge.s32.totalorder %s19, 4
      %s29 = sphi 0, %s31
      %s32 = sphi 0, %s29
      %s33 = sphi 0, %s32
      %s49 = sphi 0, %s33
      %s53 = sphi 0, %s53
      %s55 = sphi 0, %s53
      %s56 = sphi 0, %s55
      %s70 = sphi 0, %s56
      %s74 = sphi 0, %s74
      %s76 = sphi 0, %s74
      %s77 = sphi 0, %s76
      %s91 = sphi 0, %s77
      %s95 = sphi 0, %s95
      %s97 = sphi 0, %s95
      %s98 = sphi 0, %s97
      %s112 = sphi 0, %s98
      %s116 = sphi 0, %s116
      %s118 = sphi 0, %s116
      %s119 = sphi 0, %s118
      %s133 = sphi 0, %s119
      %s137 = sphi 0, %s137
      %s139 = sphi 0, %s137
      %s140 = sphi 0, %s139
      %s154 = sphi 0, %s140
      %s158 = sphi 0, %s158
      %s160 = sphi 0, %s158
      %s161 = sphi 0, %s160
      %s175 = sphi 0, %s161
      %s181 = sphi 0, %s183
      %s184 = sphi 0, %s181
      %s185 = sphi 0, %s184
      %s201 = sphi 0, %s185
    $region4: #{tpu_custom_call.1} parent=1 // loop_header_branch
      %22 = sbr.rel (%p20) target = $region8
    $region5: #{tpu_custom_call.1} parent=1 // loop_body
      %s24 = ssub.s32 %s19, 1
      %s25 = ssub.s32 %s19, 2
      %s26 = sadd.s32 %s19, 1
      %s27 = ssub.s32 %s19, %s26
      %p28 = scmp.eq.s32.totalorder %s27, 0
      %s30 = sadd.s32 %s29, 1
      %s31 = scalar_select %p28, %s29, %s30
      %p34 = pneg %p28
      %p35 = scmp.eq.s32.totalorder %s19, 1
      %p36 = por %p34, %p35
      %p37 = scmp.ne.s32.totalorder %s29, %s32
      %p38 = scmp.eq.s32.totalorder %s19, 0
      %p39 = por %p37, %p38
      %p40 = scmp.ne.s32.totalorder %s29, %s32
      %p41 = scmp.eq.s32.totalorder %s24, 1
      %p42 = por %p40, %p41
      %p43 = scmp.ne.s32.totalorder %s32, %s33
      %p44 = scmp.eq.s32.totalorder %s24, 0
      %p45 = por %p43, %p44
      %p46 = scmp.ne.s32.totalorder %s32, %s33
      %p47 = scmp.eq.s32.totalorder %s25, 1
      %p48 = por %p46, %p47
      %p50 = scmp.ne.s32.totalorder %s33, %s49
      %p51 = scmp.eq.s32.totalorder %s25, 0
      %p52 = por %p50, %p51
      %s54 = sadd.s32 %s53, 1
      %p57 = scmp.eq.s32.totalorder %s19, 1
      %p58 = scmp.ne.s32.totalorder %s53, %s55
      %p59 = scmp.eq.s32.totalorder %s19, 0
      %p60 = por %p58, %p59
      %p61 = scmp.ne.s32.totalorder %s53, %s55
      %p62 = scmp.eq.s32.totalorder %s24, 1
      %p63 = por %p61, %p62
      %p64 = scmp.ne.s32.totalorder %s55, %s56
      %p65 = scmp.eq.s32.totalorder %s24, 0
      %p66 = por %p64, %p65
      %p67 = scmp.ne.s32.totalorder %s55, %s56
      %p68 = scmp.eq.s32.totalorder %s25, 1
      %p69 = por %p67, %p68
      %p71 = scmp.ne.s32.totalorder %s56, %s70
      %p72 = scmp.eq.s32.totalorder %s25, 0
      %p73 = por %p71, %p72
      %s75 = sadd.s32 %s74, 1
      %p78 = scmp.eq.s32.totalorder %s19, 1
      %p79 = scmp.ne.s32.totalorder %s74, %s76
      %p80 = scmp.eq.s32.totalorder %s19, 0
      %p81 = por %p79, %p80
      %p82 = scmp.ne.s32.totalorder %s74, %s76
      %p83 = scmp.eq.s32.totalorder %s24, 1
      %p84 = por %p82, %p83
      %p85 = scmp.ne.s32.totalorder %s76, %s77
      %p86 = scmp.eq.s32.totalorder %s24, 0
      %p87 = por %p85, %p86
      %p88 = scmp.ne.s32.totalorder %s76, %s77
      %p89 = scmp.eq.s32.totalorder %s25, 1
      %p90 = por %p88, %p89
      %p92 = scmp.ne.s32.totalorder %s77, %s91
      %p93 = scmp.eq.s32.totalorder %s25, 0
      %p94 = por %p92, %p93
      %s96 = sadd.s32 %s95, 1
      %p99 = scmp.eq.s32.totalorder %s19, 1
      %p100 = scmp.ne.s32.totalorder %s95, %s97
      %p101 = scmp.eq.s32.totalorder %s19, 0
      %p102 = por %p100, %p101
      %p103 = scmp.ne.s32.totalorder %s95, %s97
      %p104 = scmp.eq.s32.totalorder %s24, 1
      %p105 = por %p103, %p104
      %p106 = scmp.ne.s32.totalorder %s97, %s98
      %p107 = scmp.eq.s32.totalorder %s24, 0
      %p108 = por %p106, %p107
      %p109 = scmp.ne.s32.totalorder %s97, %s98
      %p110 = scmp.eq.s32.totalorder %s25, 1
      %p111 = por %p109, %p110
      %p113 = scmp.ne.s32.totalorder %s98, %s112
      %p114 = scmp.eq.s32.totalorder %s25, 0
      %p115 = por %p113, %p114
      %s117 = sadd.s32 %s116, 1
      %p120 = scmp.eq.s32.totalorder %s19, 1
      %p121 = scmp.ne.s32.totalorder %s116, %s118
      %p122 = scmp.eq.s32.totalorder %s19, 0
      %p123 = por %p121, %p122
      %p124 = scmp.ne.s32.totalorder %s116, %s118
      %p125 = scmp.eq.s32.totalorder %s24, 1
      %p126 = por %p124, %p125
      %p127 = scmp.ne.s32.totalorder %s118, %s119
      %p128 = scmp.eq.s32.totalorder %s24, 0
      %p129 = por %p127, %p128
      %p130 = scmp.ne.s32.totalorder %s118, %s119
      %p131 = scmp.eq.s32.totalorder %s25, 1
      %p132 = por %p130, %p131
      %p134 = scmp.ne.s32.totalorder %s119, %s133
      %p135 = scmp.eq.s32.totalorder %s25, 0
      %p136 = por %p134, %p135
      %s138 = sadd.s32 %s137, 1
      %p141 = scmp.eq.s32.totalorder %s19, 1
      %p142 = scmp.ne.s32.totalorder %s137, %s139
      %p143 = scmp.eq.s32.totalorder %s19, 0
      %p144 = por %p142, %p143
      %p145 = scmp.ne.s32.totalorder %s137, %s139
      %p146 = scmp.eq.s32.totalorder %s24, 1
      %p147 = por %p145, %p146
      %p148 = scmp.ne.s32.totalorder %s139, %s140
      %p149 = scmp.eq.s32.totalorder %s24, 0
      %p150 = por %p148, %p149
      %p151 = scmp.ne.s32.totalorder %s139, %s140
      %p152 = scmp.eq.s32.totalorder %s25, 1
      %p153 = por %p151, %p152
      %p155 = scmp.ne.s32.totalorder %s140, %s154
      %p156 = scmp.eq.s32.totalorder %s25, 0
      %p157 = por %p155, %p156
      %s159 = sadd.s32 %s158, 1
      %p162 = scmp.eq.s32.totalorder %s19, 1
      %p163 = scmp.ne.s32.totalorder %s158, %s160
      %p164 = scmp.eq.s32.totalorder %s19, 0
      %p165 = por %p163, %p164
      %p166 = scmp.ne.s32.totalorder %s158, %s160
      %p167 = scmp.eq.s32.totalorder %s24, 1
      %p168 = por %p166, %p167
      %p169 = scmp.ne.s32.totalorder %s160, %s161
      %p170 = scmp.eq.s32.totalorder %s24, 0
      %p171 = por %p169, %p170
      %p172 = scmp.ne.s32.totalorder %s160, %s161
      %p173 = scmp.eq.s32.totalorder %s25, 1
      %p174 = por %p172, %p173
      %p176 = scmp.ne.s32.totalorder %s161, %s175
      %p177 = scmp.eq.s32.totalorder %s25, 0
      %p178 = por %p176, %p177
      %s179 = ssub.s32 %s19, %s26
      %p180 = scmp.eq.s32.totalorder %s179, 0
      %s182 = sadd.s32 %s181, 1
      %s183 = scalar_select %p180, %s181, %s182
      %p186 = pneg %p180
      %p187 = scmp.eq.s32.totalorder %s19, 1
      %p188 = por %p186, %p187
      %p189 = scmp.ne.s32.totalorder %s181, %s184
      %p190 = scmp.eq.s32.totalorder %s19, 0
      %p191 = por %p189, %p190
      %p192 = scmp.ne.s32.totalorder %s181, %s184
      %p193 = scmp.eq.s32.totalorder %s24, 1
      %p194 = por %p192, %p193
      %p195 = scmp.ne.s32.totalorder %s184, %s185
      %p196 = scmp.eq.s32.totalorder %s24, 0
      %p197 = por %p195, %p196
      %p198 = scmp.ne.s32.totalorder %s184, %s185
      %p199 = scmp.eq.s32.totalorder %s25, 1
      %p200 = por %p198, %p199
      %p202 = scmp.ne.s32.totalorder %s185, %s201
      %p203 = scmp.eq.s32.totalorder %s25, 0
      %p204 = por %p202, %p203
      %p205 = scmp.le.s32.totalorder 1, %s19
      %p206 = scmp.lt.s32.totalorder %s19, 3
      %p207 = pnand %p205, %p206
      %p208 = pneg %p207
      // Predicated region
      $region9: #{tpu_custom_call.1} parent=5 // pred_check
        _
      $region10: #{tpu_custom_call.1} parent=5 // pred_check_branch
        %210 = sbr.rel (%p207) target = $region12
      $region11: #{tpu_custom_call.1} parent=5 // pred_region
        %s211 = ssub.s32 %s19, 1
        // Predicated region
        $region13: #{tpu_custom_call.1} parent=11 // pred_check
          %p212 = pneg %p66
        $region14: #{tpu_custom_call.1} parent=11 // pred_check_branch
          %214 = sbr.rel (%p212) target = $region16
        $region15: #{tpu_custom_call.1} parent=11 // pred_region
          _
        $region16: #{tpu_custom_call.1} parent=11 // pred_fallthru
          _
        // Predicated region
        $region17: #{tpu_custom_call.1} parent=11 // pred_check
          %p215 = pneg %p87
        $region18: #{tpu_custom_call.1} parent=11 // pred_check_branch
          %217 = sbr.rel (%p215) target = $region20
        $region19: #{tpu_custom_call.1} parent=11 // pred_region
          %s219 = ssub.s32 16, 16
          %220 = vsyncadd [#allocation6], %s219
          %s222 = sshll.u32 [#allocation5], 4
          %s223 = int_to_ptr.vmem [resolvable:$true] %s222
          %225 = dma.hbm_to_vmem [thread:$0]  %s2, 16, %s223, [#allocation6]
        $region20: #{tpu_custom_call.1} parent=11 // pred_fallthru
          _
        // Predicated region
        $region21: #{tpu_custom_call.1} parent=11 // pred_check
          %p226 = pneg %p108
        $region22: #{tpu_custom_call.1} parent=11 // pred_check_branch
          %228 = sbr.rel (%p226) target = $region24
        $region23: #{tpu_custom_call.1} parent=11 // pred_region
          _
        $region24: #{tpu_custom_call.1} parent=11 // pred_fallthru
          _
        // Predicated region
        $region25: #{tpu_custom_call.1} parent=11 // pred_check
          %p229 = pneg %p129
        $region26: #{tpu_custom_call.1} parent=11 // pred_check_branch
          %231 = sbr.rel (%p229) target = $region28
        $region27: #{tpu_custom_call.1} parent=11 // pred_region
          _
        $region28: #{tpu_custom_call.1} parent=11 // pred_fallthru
          _
        // Predicated region
        $region29: #{tpu_custom_call.1} parent=11 // pred_check
          %p232 = pneg %p150
        $region30: #{tpu_custom_call.1} parent=11 // pred_check_branch
          %234 = sbr.rel (%p232) target = $region32
        $region31: #{tpu_custom_call.1} parent=11 // pred_region
          _
        $region32: #{tpu_custom_call.1} parent=11 // pred_fallthru
          _
        // Predicated region
        $region33: #{tpu_custom_call.1} parent=11 // pred_check
          %p235 = pneg %p171
        $region34: #{tpu_custom_call.1} parent=11 // pred_check_branch
          %237 = sbr.rel (%p235) target = $region36
        $region35: #{tpu_custom_call.1} parent=11 // pred_region
          _
        $region36: #{tpu_custom_call.1} parent=11 // pred_fallthru
          _
      $region12: #{tpu_custom_call.1} parent=5 // pred_fallthru
        _
      %p238 = scmp.lt.s32.totalorder %s19, 2
      // Predicated region
      $region37: #{tpu_custom_call.1} parent=5 // pred_check
        %p239 = pneg %p238
      $region38: #{tpu_custom_call.1} parent=5 // pred_check_branch
        %241 = sbr.rel (%p239) target = $region40
      $region39: #{tpu_custom_call.1} parent=5 // pred_region
        // Predicated region
        $region41: #{tpu_custom_call.1} parent=39 // pred_check
          %p242 = pneg %p39
        $region42: #{tpu_custom_call.1} parent=39 // pred_check_branch
          %244 = sbr.rel (%p242) target = $region44
        $region43: #{tpu_custom_call.1} parent=39 // pred_region
          %s245 = sand.u32 %s29, 1
          %s246 = scalar_lea.sflag [#allocation4], %s245
          %s247 = sand.u32 %s29, 1
          %s248 = smul.addr %s247, 4
          %s249 = scalar_lea.vmem [#allocation3], %s248
          %s251 = ssub.s32 64, 64
          %252 = vsyncadd %s246, %s251
          %s253 = smul.addr %s19, 64
          %s254 = scalar_lea.hbm %s0, %s253
          %s256 = sshll.u32 %s249, 4
          %s257 = int_to_ptr.vmem [resolvable:$true] %s256
          %259 = dma.hbm_to_vmem [thread:$0]  %s254, 64, %s257, %s246
        $region44: #{tpu_custom_call.1} parent=39 // pred_fallthru
          _
      $region40: #{tpu_custom_call.1} parent=5 // pred_fallthru
        _
      %p260 = scmp.le.s32.totalorder 1, %s19
      %p261 = scmp.lt.s32.totalorder %s19, 3
      %p262 = pnand %p260, %p261
      %p263 = pneg %p262
      // Predicated region
      $region45: #{tpu_custom_call.1} parent=5 // pred_check
        _
      $region46: #{tpu_custom_call.1} parent=5 // pred_check_branch
        %265 = sbr.rel (%p262) target = $region48
      $region47: #{tpu_custom_call.1} parent=5 // pred_region
        %s266 = ssub.s32 %s19, 1
        %s267 = sand.u32 %s32, 1
        %s268 = scalar_lea.sflag [#allocation4], %s267
        %s269 = sand.u32 %s32, 1
        %s270 = smul.addr %s269, 4
        %s271 = scalar_lea.vmem [#allocation3], %s270
        // Predicated region
        $region49: #{tpu_custom_call.1} parent=47 // pred_check
          %p272 = pneg %p45
        $region50: #{tpu_custom_call.1} parent=47 // pred_check_branch
          %274 = sbr.rel (%p272) target = $region52
        $region51: #{tpu_custom_call.1} parent=47 // pred_region
          %275 = dma.done %s268, 64
        $region52: #{tpu_custom_call.1} parent=47 // pred_fallthru
          _
        // Predicated region
        $region53: #{tpu_custom_call.1} parent=47 // pred_check
          %p276 = pneg %p87
        $region54: #{tpu_custom_call.1} parent=47 // pred_check_branch
          %278 = sbr.rel (%p276) target = $region56
        $region55: #{tpu_custom_call.1} parent=47 // pred_region
          %279 = dma.done [#allocation6], 16
        $region56: #{tpu_custom_call.1} parent=47 // pred_fallthru
          _
        %s280 = sand.u32 %s32, 1
        %s281 = scalar_lea.sflag [#allocation4], %s280
        %s282 = sand.u32 %s32, 1
        %s283 = smul.addr %s282, 4
        %s284 = scalar_lea.vmem [#allocation3], %s283
        %p285 = pneg %p45
        %p286 = pneg %p42
        %p287 = pneg %p66
        %p288 = pneg %p63
        %p289 = pneg %p87
        %p290 = pneg %p84
        %p291 = pneg %p108
        %p292 = pneg %p105
        %p293 = pneg %p129
        %p294 = pneg %p126
        %p295 = pneg %p150
        %p296 = pneg %p147
        %p297 = pneg %p171
        %p298 = pneg %p168
        %p299 = pneg %p197
        %p300 = pneg %p194
        %p301 = scmp.lt.s32.totalorder %s24, 1
        %s302 = scalar_select %p301, %s24, 1
        %s303 = smul.addr %s302, 8
        %s304 = scalar_lea.vmem %s7, %s303
        %p305 = scmp.lt.s32.totalorder %s24, 1
        %s306 = scalar_select %p305, %s24, 1
        %s307 = smul.addr %s306, 8
        %s308 = scalar_lea.vmem %s7, %s307
        %v310 = vld [vmem:[%s271] sm:$0xf]
        %v311 = vld [vmem:[%s1] sm:$0xf]
        %v312 = vld [vmem:[%s1 + $0x4] sm:$0xf]
        %v313 = vld [vmem:[%s1 + $0x8] sm:$0xf]
        %v314 = vld [vmem:[%s1 + $0xc] sm:$0xf]
        %v315 = vld [vmem:[#allocation5] sm:$0x1]
        %v317 = vlaneseq
        %v318 = vshrl.u32 %v317, 7
        %v319 = vsub.s32 0, %v318
        %v320 = vrot.slane %v315, %v319
        %v326 = vunpack.c.l.b16 %v311
        %v327 = vunpack.c.l.b16 %v312
        %v328 = vunpack.c.l.b16 %v313
        %v329 = vunpack.c.l.b16 %v314
        %v330 = vpack.c.b16 %v327, %v326
        %v331 = vpack.c.b16 %v329, %v328
        %vm334 = vcmask 261120
        %v336 = vsel %vm334, %v310, 0
        %338 = vmatprep.subr.bf16.mxu0 0
        %339 = vmatpush1.bf16.msra.mxu0 %v330
        %340 = vmatprep.subr.bf16.mxu0 0
        %341 = vmatpush1.bf16.msra.mxu0 %v331
        %342 = vmatprep.subr.bf16.mxu0 0
        %343 = vmatpush1.bf16.msra.mxu0 0
        %344 = vmatprep.subr.bf16.mxu0 0
        %345 = vmatpush1.bf16.msra.mxu0 0
        %346 = vmatprep.subr.bf16.mxu0 0
        %347 = vmatpush1.bf16.msra.mxu0 0
        %348 = vmatprep.subr.bf16.mxu0 0
        %349 = vmatpush1.bf16.msra.mxu0 0
        %350 = vmatprep.subr.bf16.mxu0 0
        %351 = vmatpush1.bf16.msra.mxu0 0
        %352 = vmatprep.subr.bf16.mxu0 0
        %353 = vmatpush1.bf16.msra.mxu0 0
        %354 = vmatprep.subr.bf16.mxu0 0
        %355 = vmatpush1.bf16.msra.mxu0 0
        %356 = vmatprep.subr.bf16.mxu0 0
        %357 = vmatpush1.bf16.msra.mxu0 0
        %358 = vmatprep.subr.bf16.mxu0 0
        %359 = vmatpush1.bf16.msra.mxu0 0
        %360 = vmatprep.subr.bf16.mxu0 0
        %361 = vmatpush1.bf16.msra.mxu0 0
        %362 = vmatprep.subr.bf16.mxu0 0
        %363 = vmatpush1.bf16.msra.mxu0 0
        %364 = vmatprep.subr.bf16.mxu0 0
        %365 = vmatpush1.bf16.msra.mxu0 0
        %366 = vmatprep.subr.bf16.mxu0 0
        %367 = vmatpush1.bf16.msra.mxu0 0
        %368 = vmatprep.subr.bf16.mxu0 0
        %369 = vmatpush1.bf16.msra.mxu0 0
        %370 = vmatprep.mubr.bf16.mxu0 0
        %371 = vmatmul.mubr.bf16.gmra.mrb[0].mxu0 %v336
        %v372 = vpop.f32.mrb[0].mxu0
        %v373 = vadd.f32 %v320, %v372
        %v374 = vpop.f32.mrb[0].mxu0
        %v375 = vpop.f32.mrb[0].mxu0
        %v376 = vpop.f32.mrb[0].mxu0
        %377 = vdwg.mxu0
        %v378 = vmax.f32 %v373, 0.0
        %v379 = vpack.c.bf16 %v378, %v378
        %v380 = vld [vmem:[%s3] sm:$0xf]
        %v381 = vld [vmem:[%s3 + $0x4] sm:$0xf]
        %v382 = vld [vmem:[%s3 + $0x8] sm:$0xf]
        %v383 = vld [vmem:[%s3 + $0xc] sm:$0xf]
        %v384 = vld [vmem:[%s3 + $0x10] sm:$0xf]
        %v385 = vld [vmem:[%s3 + $0x14] sm:$0xf]
        %v386 = vld [vmem:[%s3 + $0x18] sm:$0xf]
        %v387 = vld [vmem:[%s3 + $0x1c] sm:$0xf]
        %v388 = vld [vmem:[%s4] sm:$0x1]
        %v390 = vlaneseq
        %v391 = vshrl.u32 %v390, 7
        %v392 = vsub.s32 0, %v391
        %v393 = vrot.slane %v388, %v392
        %v403 = vunpack.c.l.b16 %v380
        %v404 = vunpack.c.l.b16 %v381
        %v405 = vunpack.c.l.b16 %v382
        %v406 = vunpack.c.l.b16 %v383
        %v407 = vunpack.c.l.b16 %v384
        %v408 = vunpack.c.l.b16 %v385
        %v409 = vunpack.c.l.b16 %v386
        %v410 = vunpack.c.l.b16 %v387
        %v411 = vpack.c.b16 %v404, %v403
        %v412 = vpack.c.b16 %v406, %v405
        %v413 = vpack.c.b16 %v408, %v407
        %v414 = vpack.c.b16 %v410, %v409
        %vm419 = vcmask 523264
        %v421 = vsel %vm419, %v379, 0
        %423 = vmatprep.subr.bf16.mxu0 0
        %424 = vmatpush1.bf16.msra.mxu0 %v411
        %425 = vmatprep.subr.bf16.mxu0 0
        %426 = vmatpush1.bf16.msra.mxu0 %v412
        %427 = vmatprep.subr.bf16.mxu0 0
        %428 = vmatpush1.bf16.msra.mxu0 %v413
        %429 = vmatprep.subr.bf16.mxu0 0
        %430 = vmatpush1.bf16.msra.mxu0 %v414
        %431 = vmatprep.subr.bf16.mxu0 0
        %432 = vmatpush1.bf16.msra.mxu0 0
        %433 = vmatprep.subr.bf16.mxu0 0
        %434 = vmatpush1.bf16.msra.mxu0 0
        %435 = vmatprep.subr.bf16.mxu0 0
        %436 = vmatpush1.bf16.msra.mxu0 0
        %437 = vmatprep.subr.bf16.mxu0 0
        %438 = vmatpush1.bf16.msra.mxu0 0
        %439 = vmatprep.subr.bf16.mxu0 0
        %440 = vmatpush1.bf16.msra.mxu0 0
        %441 = vmatprep.subr.bf16.mxu0 0
        %442 = vmatpush1.bf16.msra.mxu0 0
        %443 = vmatprep.subr.bf16.mxu0 0
        %444 = vmatpush1.bf16.msra.mxu0 0
        %445 = vmatprep.subr.bf16.mxu0 0
        %446 = vmatpush1.bf16.msra.mxu0 0
        %447 = vmatprep.subr.bf16.mxu0 0
        %448 = vmatpush1.bf16.msra.mxu0 0
        %449 = vmatprep.subr.bf16.mxu0 0
        %450 = vmatpush1.bf16.msra.mxu0 0
        %451 = vmatprep.subr.bf16.mxu0 0
        %452 = vmatpush1.bf16.msra.mxu0 0
        %453 = vmatprep.subr.bf16.mxu0 0
        %454 = vmatpush1.bf16.msra.mxu0 0
        %455 = vmatprep.mubr.bf16.mxu0 0
        %456 = vmatmul.mubr.bf16.gmra.mrb[0].mxu0 %v421
        %v457 = vpop.f32.mrb[0].mxu0
        %v458 = vadd.f32 %v393, %v457
        %v459 = vpop.f32.mrb[0].mxu0
        %v460 = vpop.f32.mrb[0].mxu0
        %v461 = vpop.f32.mrb[0].mxu0
        %462 = vdwg.mxu0
        %v463 = vmax.f32 %v458, 0.0
        %v464 = vpack.c.bf16 %v463, %v463
        %v465 = vld [vmem:[%s5] sm:$0xf]
        %v466 = vld [vmem:[%s5 + $0x4] sm:$0xf]
        %v467 = vld [vmem:[%s5 + $0x8] sm:$0xf]
        %v468 = vld [vmem:[%s5 + $0xc] sm:$0xf]
        %v469 = vld [vmem:[%s5 + $0x10] sm:$0xf]
        %v470 = vld [vmem:[%s5 + $0x14] sm:$0xf]
        %v471 = vld [vmem:[%s5 + $0x18] sm:$0xf]
        %v472 = vld [vmem:[%s5 + $0x1c] sm:$0xf]
        %v473 = vld [vmem:[#allocation2] sm:$0x1]
        %v475 = vlaneseq
        %v476 = vshrl.u32 %v475, 7
        %v477 = vsub.s32 0, %v476
        %v478 = vrot.slane %v473, %v477
        %v488 = vunpack.c.l.b16 %v465
        %v489 = vunpack.c.l.b16 %v466
        %v490 = vunpack.c.l.b16 %v467
        %v491 = vunpack.c.l.b16 %v468
        %v492 = vunpack.c.l.b16 %v469
        %v493 = vunpack.c.l.b16 %v470
        %v494 = vunpack.c.l.b16 %v471
        %v495 = vunpack.c.l.b16 %v472
        %v496 = vpack.c.b16 %v489, %v488
        %v497 = vpack.c.b16 %v491, %v490
        %v498 = vpack.c.b16 %v493, %v492
        %v499 = vpack.c.b16 %v495, %v494
        %v505 = vsel %vm419, %v464, 0
        %507 = vmatprep.subr.bf16.mxu0 0
        %508 = vmatpush1.bf16.msra.mxu0 %v496
        %509 = vmatprep.subr.bf16.mxu0 0
        %510 = vmatpush1.bf16.msra.mxu0 %v497
        %511 = vmatprep.subr.bf16.mxu0 0
        %512 = vmatpush1.bf16.msra.mxu0 %v498
        %513 = vmatprep.subr.bf16.mxu0 0
        %514 = vmatpush1.bf16.msra.mxu0 %v499
        %515 = vmatprep.subr.bf16.mxu0 0
        %516 = vmatpush1.bf16.msra.mxu0 0
        %517 = vmatprep.subr.bf16.mxu0 0
        %518 = vmatpush1.bf16.msra.mxu0 0
        %519 = vmatprep.subr.bf16.mxu0 0
        %520 = vmatpush1.bf16.msra.mxu0 0
        %521 = vmatprep.subr.bf16.mxu0 0
        %522 = vmatpush1.bf16.msra.mxu0 0
        %523 = vmatprep.subr.bf16.mxu0 0
        %524 = vmatpush1.bf16.msra.mxu0 0
        %525 = vmatprep.subr.bf16.mxu0 0
        %526 = vmatpush1.bf16.msra.mxu0 0
        %527 = vmatprep.subr.bf16.mxu0 0
        %528 = vmatpush1.bf16.msra.mxu0 0
        %529 = vmatprep.subr.bf16.mxu0 0
        %530 = vmatpush1.bf16.msra.mxu0 0
        %531 = vmatprep.subr.bf16.mxu0 0
        %532 = vmatpush1.bf16.msra.mxu0 0
        %533 = vmatprep.subr.bf16.mxu0 0
        %534 = vmatpush1.bf16.msra.mxu0 0
        %535 = vmatprep.subr.bf16.mxu0 0
        %536 = vmatpush1.bf16.msra.mxu0 0
        %537 = vmatprep.subr.bf16.mxu0 0
        %538 = vmatpush1.bf16.msra.mxu0 0
        %539 = vmatprep.mubr.bf16.mxu0 0
        %540 = vmatmul.mubr.bf16.gmra.mrb[0].mxu0 %v505
        %v541 = vpop.f32.mrb[0].mxu0
        %v542 = vadd.f32 %v478, %v541
        %v543 = vpop.f32.mrb[0].mxu0
        %v544 = vpop.f32.mrb[0].mxu0
        %v545 = vpop.f32.mrb[0].mxu0
        %546 = vdwg.mxu0
        %vm547 = vcmask 7168
        %548 = vst.msk [vmem:[%s308] sm:$0xff] %vm547, %v542
        %p549 = scmp.lt.s32.totalorder %s24, 1
        %s550 = scalar_select %p549, %s24, 1
        %s551 = smul.addr %s550, 8
        %s552 = scalar_lea.vmem %s7, %s551
        // Predicated region
        $region57: #{tpu_custom_call.1} parent=47 // pred_check
          %p553 = pneg %p194
        $region58: #{tpu_custom_call.1} parent=47 // pred_check_branch
          %555 = sbr.rel (%p553) target = $region60
        $region59: #{tpu_custom_call.1} parent=47 // pred_region
          _
        $region60: #{tpu_custom_call.1} parent=47 // pred_fallthru
          _
      $region48: #{tpu_custom_call.1} parent=5 // pred_fallthru
        _
      %p556 = scmp.le.s32.totalorder 2, %s19
      // Predicated region
      $region61: #{tpu_custom_call.1} parent=5 // pred_check
        %p557 = pneg %p556
      $region62: #{tpu_custom_call.1} parent=5 // pred_check_branch
        %559 = sbr.rel (%p557) target = $region64
      $region63: #{tpu_custom_call.1} parent=5 // pred_region
        %s560 = ssub.s32 %s19, 2
        // Predicated region
        $region65: #{tpu_custom_call.1} parent=63 // pred_check
          %p561 = pneg %p200
        $region66: #{tpu_custom_call.1} parent=63 // pred_check_branch
          %563 = sbr.rel (%p561) target = $region68
        $region67: #{tpu_custom_call.1} parent=63 // pred_region
          %p564 = scmp.lt.s32.totalorder %s25, 1
          %s565 = scalar_select %p564, %s25, 1
          %s566 = smul.addr %s565, 8
          %s567 = scalar_lea.vmem %s7, %s566
        $region68: #{tpu_custom_call.1} parent=63 // pred_fallthru
          _
      $region64: #{tpu_custom_call.1} parent=5 // pred_fallthru
        _
    $region6: #{tpu_custom_call.1} parent=1 // loop_footer
      %s23 = sadd.s32 1, %s19
    $region7: #{tpu_custom_call.1} parent=1 // loop_footer_branch
      %18 = sbr.rel target = $region3
    $region8: #{tpu_custom_call.1} parent=1 // loop_exit
      _
    %568 = vsyncpa [#allocation4], 1
    %s569 = scalar_lea.sflag [#allocation4], 1
    %570 = vsyncpa %s569, 1
    %571 = vsyncpa [#allocation6], 1

</llo_original>
